<compile_context>
chip_gen: v5e
topology: v5e:2x2
jax: 0.10.0
libtpu: 0.0.40
codegen_flags: <defaults>
</compile_context>

<pallas_src>
import jax
import jax.numpy as jnp
from jax import lax
from jax.experimental import pallas as pl
from jax.experimental.pallas import tpu as pltpu

F_IN = 512
F_OUT = 512
BN_EPS = 1e-5
TF = 256  # output-feature tile (2 slabs -> megacore split on v7x)


def _sim_projector_kernel(x_ref, w_ref, gamma_ref, beta_ref, o_ref):
    # Linear (bias omitted: it cancels exactly under training-mode BatchNorm).
    y = jnp.dot(x_ref[...], w_ref[...], preferred_element_type=jnp.float32)

    # BatchNorm1d, training mode: per-feature mean and *biased* variance over
    # the batch axis, then affine scale/shift.
    n = y.shape[0]
    inv_n = 1.0 / n
    mean = jnp.sum(y, axis=0, keepdims=True) * inv_n
    diff = y - mean
    var = jnp.sum(diff * diff, axis=0, keepdims=True) * inv_n
    scale = lax.rsqrt(var + BN_EPS) * gamma_ref[...]      # gamma fused into [1,TF]
    o_ref[...] = diff * scale + beta_ref[...]


def _vmem_limit_bytes(n: int, tf: int) -> int:
    f32 = 4
    x_bytes = n * F_IN * f32                      # resident across the grid
    w_tile = F_IN * tf * f32                      # double-buffered
    out_tile = n * tf * f32                       # double-buffered
    vec_tiles = 2 * tf * f32                      # gamma + beta tiles
    temps = 2 * n * tf * f32                      # y / diff live values
    est = x_bytes + 2 * (w_tile + out_tile + vec_tiles) + temps
    est = int(est * 1.5) + (1 << 20)              # headroom
    return max(16 << 20, min(est, 48 << 20))


def sim_projector_forward(x, w, b, gamma, beta, *, tf: int = TF):
    """x: [N, 512] f32.  w: [512, 512] stored (in, out) == W.T.
    b/gamma/beta: [512].  Returns [N, 512] f32 (training-mode BN output)."""
    del b  # exact cancellation under mean subtraction (see header comment)
    n = x.shape[0]
    g2 = gamma.reshape(1, F_OUT)
    be2 = beta.reshape(1, F_OUT)

    assert F_OUT % tf == 0
    grid = (F_OUT // tf,)

    grid_spec = pltpu.PrefetchScalarGridSpec(
        num_scalar_prefetch=0,
        grid=grid,
        in_specs=[
            pl.BlockSpec((n, F_IN), lambda j: (0, 0)),   # x: full, stays resident
            pl.BlockSpec((F_IN, tf), lambda j: (0, j)),  # W feature slab
            pl.BlockSpec((1, tf), lambda j: (0, j)),     # gamma slab
            pl.BlockSpec((1, tf), lambda j: (0, j)),     # beta slab
        ],
        out_specs=pl.BlockSpec((n, tf), lambda j: (0, j)),
    )

    return pl.pallas_call(
        _sim_projector_kernel,
        out_shape=jax.ShapeDtypeStruct((n, F_OUT), jnp.float32),
        grid_spec=grid_spec,
        compiler_params=pltpu.CompilerParams(
            dimension_semantics=("parallel",),
            vmem_limit_bytes=_vmem_limit_bytes(n, tf),
        ),
    )(x, w, g2, be2)


def _ref_forward(x, w, b, gamma, beta):
    # Faithful reference INCLUDING the linear bias, to confirm the in-kernel
    # bias-drop is an exact equivalence.
    y = x @ w + b[None, :]
    mean = y.mean(axis=0, keepdims=True)
    var = ((y - mean) ** 2).mean(axis=0, keepdims=True)
    return (y - mean) / jnp.sqrt(var + BN_EPS) * gamma[None, :] + beta[None, :]


if __name__ == "__main__":
    key = jax.random.PRNGKey(0)
    k_x, k_w, k_b = jax.random.split(key, 3)

    N = 8  # small batch; feature widths are fixed at 512 by the module
    x = jax.random.normal(k_x, (N, F_IN), dtype=jnp.float32)

    # nn.Linear default init: U(-1/sqrt(fan_in), 1/sqrt(fan_in)).
    bound = 1.0 / (F_IN ** 0.5)
    w = jax.random.uniform(k_w, (F_IN, F_OUT), minval=-bound, maxval=bound,
                           dtype=jnp.float32)  # stored as (in, out) == W.T
    b = jax.random.uniform(k_b, (F_OUT,), minval=-bound, maxval=bound,
                           dtype=jnp.float32)
    gamma = jnp.ones((F_OUT,), dtype=jnp.float32)   # BatchNorm1d weight
    beta = jnp.zeros((F_OUT,), dtype=jnp.float32)   # BatchNorm1d bias

    out = sim_projector_forward(x, w, b, gamma, beta)
    out = jax.block_until_ready(out)

    ref = _ref_forward(x, w, b, gamma, beta)
    assert out.shape == (N, F_OUT)
    assert jnp.allclose(out, ref, atol=1e-4, rtol=1e-4)

    print("KERNEL_OK")
</pallas_src>

<mosaic_0001>
module attributes {stable_mosaic.version = 11 : i64} {
  func.func @_sim_projector_kernel(%arg0: i32, %arg1: memref<8x512xf32, #tpu.memory_space<vmem>>, %arg2: memref<512x256xf32, #tpu.memory_space<vmem>>, %arg3: memref<1x256xf32, #tpu.memory_space<vmem>>, %arg4: memref<1x256xf32, #tpu.memory_space<vmem>>, %arg5: memref<8x256xf32, #tpu.memory_space<vmem>>) attributes {dimension_semantics = [#tpu.dimension_semantics<parallel>], iteration_bounds = array<i64: 2>, scalar_prefetch = 0 : i64, scratch_operands = 0 : i64, tpu.core_type = #tpu.core_type<tc>, window_params = [{pipeline_mode = #tpu.pipeline_mode<synchronous>, transform_indices = @transform_0, window_bounds = array<i64: 8, 512>}, {transform_indices = @transform_1, window_bounds = array<i64: 512, 256>}, {transform_indices = @transform_2, window_bounds = array<i64: 1, 256>}, {transform_indices = @transform_3, window_bounds = array<i64: 1, 256>}, {transform_indices = @transform_4, window_bounds = array<i64: 8, 256>}]} {
    %c0 = arith.constant 0 : index
    %c0_0 = arith.constant 0 : index
    %0 = vector.load %arg1[%c0, %c0_0] : memref<8x512xf32, #tpu.memory_space<vmem>>, vector<8x512xf32>
    %c0_1 = arith.constant 0 : index
    %c0_2 = arith.constant 0 : index
    %1 = vector.load %arg2[%c0_1, %c0_2] : memref<512x256xf32, #tpu.memory_space<vmem>>, vector<512x256xf32>
    %cst = arith.constant dense<0.000000e+00> : vector<8x256xf32>
    %2 = tpu.matmul %0, %1, %cst {dimension_numbers = #tpu.dot_dimension_numbers<[1], [0], [0], [1], [0, 0, 1, 1], [], []>} : vector<8x512xf32>, vector<512x256xf32>, vector<8x256xf32> -> vector<8x256xf32>
    %cst_3 = arith.constant dense<0.000000e+00> : vector<256xf32>
    %3 = vector.multi_reduction <add>, %2, %cst_3 [0] : vector<8x256xf32> to vector<256xf32>
    %4 = vector.shape_cast %3 : vector<256xf32> to vector<1x256xf32>
    %cst_4 = arith.constant 1.250000e-01 : f32
    %5 = vector.broadcast %cst_4 : f32 to vector<1x256xf32>
    %6 = arith.mulf %4, %5 : vector<1x256xf32>
    %7 = vector.broadcast %6 : vector<1x256xf32> to vector<8x256xf32>
    %8 = arith.subf %2, %7 : vector<8x256xf32>
    %9 = arith.mulf %8, %8 : vector<8x256xf32>
    %cst_5 = arith.constant dense<0.000000e+00> : vector<256xf32>
    %10 = vector.multi_reduction <add>, %9, %cst_5 [0] : vector<8x256xf32> to vector<256xf32>
    %11 = vector.shape_cast %10 : vector<256xf32> to vector<1x256xf32>
    %cst_6 = arith.constant 1.250000e-01 : f32
    %12 = vector.broadcast %cst_6 : f32 to vector<1x256xf32>
    %13 = arith.mulf %11, %12 : vector<1x256xf32>
    %cst_7 = arith.constant 9.99999974E-6 : f32
    %14 = vector.broadcast %cst_7 : f32 to vector<1x256xf32>
    %15 = arith.addf %13, %14 : vector<1x256xf32>
    %16 = math.rsqrt %15 : vector<1x256xf32>
    %c0_8 = arith.constant 0 : index
    %c0_9 = arith.constant 0 : index
    %17 = vector.load %arg3[%c0_8, %c0_9] : memref<1x256xf32, #tpu.memory_space<vmem>>, vector<1x256xf32>
    %18 = arith.mulf %16, %17 : vector<1x256xf32>
    %19 = vector.broadcast %18 : vector<1x256xf32> to vector<8x256xf32>
    %20 = arith.mulf %8, %19 : vector<8x256xf32>
    %c0_10 = arith.constant 0 : index
    %c0_11 = arith.constant 0 : index
    %21 = vector.load %arg4[%c0_10, %c0_11] : memref<1x256xf32, #tpu.memory_space<vmem>>, vector<1x256xf32>
    %22 = vector.broadcast %21 : vector<1x256xf32> to vector<8x256xf32>
    %23 = arith.addf %20, %22 : vector<8x256xf32>
    %c0_12 = arith.constant 0 : index
    %c0_13 = arith.constant 0 : index
    %24 = vector.load %arg5[%c0_12, %c0_13] : memref<8x256xf32, #tpu.memory_space<vmem>>, vector<8x256xf32>
    tpu.vector_store %arg5[%c0_12, %c0_13], %23 {strides = array<i32>} : memref<8x256xf32, #tpu.memory_space<vmem>>, vector<8x256xf32>,
    return
  }
  func.func @transform_0(%arg0: i32) -> (i32, i32) {
    %c0_i32 = arith.constant 0 : i32
    %c0_i32_0 = arith.constant 0 : i32
    %c0_i32_1 = arith.constant 0 : i32
    return %c0_i32, %c0_i32_0 : i32, i32
  }
  func.func @transform_1(%arg0: i32) -> (i32, i32) {
    %c0_i32 = arith.constant 0 : i32
    %c0_i32_0 = arith.constant 0 : i32
    return %c0_i32, %arg0 : i32, i32
  }
  func.func @transform_2(%arg0: i32) -> (i32, i32) {
    %c0_i32 = arith.constant 0 : i32
    %c0_i32_0 = arith.constant 0 : i32
    return %c0_i32, %arg0 : i32, i32
  }
  func.func @transform_3(%arg0: i32) -> (i32, i32) {
    %c0_i32 = arith.constant 0 : i32
    %c0_i32_0 = arith.constant 0 : i32
    return %c0_i32, %arg0 : i32, i32
  }
  func.func @transform_4(%arg0: i32) -> (i32, i32) {
    %c0_i32 = arith.constant 0 : i32
    %c0_i32_0 = arith.constant 0 : i32
    return %c0_i32, %arg0 : i32, i32
  }
}

</mosaic_0001>

<llo_original>
// kernel: tpu_custom_call.1
$region0: #{tpu_custom_call.1}
  #allocation0 [shape = 'u32[]', space=smem, size = 0x4, offset = 0x4, fixed_abs, tag = 'smem constant byte address 0x4 - core index']
  #allocation1 [shape = 'u32[72,128]{1,0:T(1,128)}', space=vmem, size = 0x9000, scoped, tag = 'internal scratch']
  %s0 = inlined_call_operand.hbm [shape: f32[8,512], index: 0, kind: input, shape index: {}]
  %s1 = inlined_call_operand.hbm [shape: f32[512,512], index: 1, kind: input, shape index: {}]
  %s2 = inlined_call_operand.hbm [shape: f32[1,512], index: 2, kind: input, shape index: {}]
  %s3 = inlined_call_operand.hbm [shape: f32[1,512], index: 3, kind: input, shape index: {}]
  %s4 = inlined_call_operand.hbm [shape: f32[8,512], index: 4, kind: output, shape index: {}]
  %s5 = sld [smem:[#allocation0]]
  $region65: #{tpu_custom_call.1} parent=0
    _
  %s7 = ssub.s32 1, %s5
  %s8 = scalar_select 0, %s7, %s5
  $region1: #{tpu_custom_call.1} parent=0
    #allocation2 [shape = 'u8[16384]{0}', space=vmem, size = 0x4000, scoped, tag = 'input window, operand 0, single buffered']
    #allocation3 [shape = 's32[2]{0}', space=sflag, size = 0x8, scoped, tag = 'scoped memory for tpu_custom_call.1']
    #allocation4 [shape = 's32[2]{0}', space=sflag, size = 0x8, scoped, tag = 'scoped memory for tpu_custom_call.1']
    #allocation5 [shape = 'u8[1048576]{0}', space=vmem, size = 0x100000, scoped, tag = 'input window, operand 1']
    #allocation6 [shape = 's32[2]{0}', space=sflag, size = 0x8, scoped, tag = 'scoped memory for tpu_custom_call.1']
    #allocation7 [shape = 'u8[2048]{0}', space=vmem, size = 0x800, scoped, tag = 'input window, operand 2']
    #allocation8 [shape = 'u8[2048]{0}', space=vmem, size = 0x800, scoped, tag = 'input window, operand 3']
    #allocation9 [shape = 's32[2]{0}', space=sflag, size = 0x8, scoped, tag = 'scoped memory for tpu_custom_call.1']
    #allocation10 [shape = 'u8[16384]{0}', space=vmem, size = 0x4000, scoped, tag = 'output window, operand 0']
    %9 = vsyncpa [#allocation3], 0
    %10 = vsyncpa [#allocation6], 0
    %s11 = scalar_lea.sflag [#allocation6], 1
    %12 = vsyncpa %s11, 0
    %13 = vsyncpa [#allocation9], 0
    %s14 = scalar_lea.sflag [#allocation9], 1
    %15 = vsyncpa %s14, 0
    %16 = vsyncpa [#allocation4], 0
    %s17 = scalar_lea.sflag [#allocation4], 1
    %18 = vsyncpa %s17, 0
    loop: start=0, step=1, limit=4
    $region2: #{tpu_custom_call.1} parent=1 // loop_pre_header
      _
    $region3: #{tpu_custom_call.1} parent=1 // loop_header
      %s20 = sphi 0, %s24
      %p21 = scmp.ge.s32.totalorder %s20, 4
      %s28 = sphi 0, %s28
      %s30 = sphi 0, %s28
      %s31 = sphi 0, %s30
      %s45 = sphi 0, %s31
      %s51 = sphi 0, %s53
      %s54 = sphi 0, %s51
      %s55 = sphi 0, %s54
      %s71 = sphi 0, %s55
      %s77 = sphi 0, %s79
      %s80 = sphi 0, %s77
      %s81 = sphi 0, %s80
      %s97 = sphi 0, %s81
      %s103 = sphi 0, %s105
      %s106 = sphi 0, %s103
      %s107 = sphi 0, %s106
      %s123 = sphi 0, %s107
      %s129 = sphi 0, %s131
      %s132 = sphi 0, %s129
      %s133 = sphi 0, %s132
      %s149 = sphi 0, %s133
    $region4: #{tpu_custom_call.1} parent=1 // loop_header_branch
      %23 = sbr.rel (%p21) target = $region8
    $region5: #{tpu_custom_call.1} parent=1 // loop_body
      %s25 = ssub.s32 %s20, 1
      %s26 = ssub.s32 %s20, 2
      %s27 = sadd.s32 %s20, 1
      %s29 = sadd.s32 %s28, 1
      %p32 = scmp.eq.s32.totalorder %s20, 1
      %p33 = scmp.ne.s32.totalorder %s28, %s30
      %p34 = scmp.eq.s32.totalorder %s20, 0
      %p35 = por %p33, %p34
      %p36 = scmp.ne.s32.totalorder %s28, %s30
      %p37 = scmp.eq.s32.totalorder %s25, 1
      %p38 = por %p36, %p37
      %p39 = scmp.ne.s32.totalorder %s30, %s31
      %p40 = scmp.eq.s32.totalorder %s25, 0
      %p41 = por %p39, %p40
      %p42 = scmp.ne.s32.totalorder %s30, %s31
      %p43 = scmp.eq.s32.totalorder %s26, 1
      %p44 = por %p42, %p43
      %p46 = scmp.ne.s32.totalorder %s31, %s45
      %p47 = scmp.eq.s32.totalorder %s26, 0
      %p48 = por %p46, %p47
      %s49 = ssub.s32 %s20, %s27
      %p50 = scmp.eq.s32.totalorder %s49, 0
      %s52 = sadd.s32 %s51, 1
      %s53 = scalar_select %p50, %s51, %s52
      %p56 = pneg %p50
      %p57 = scmp.eq.s32.totalorder %s20, 1
      %p58 = por %p56, %p57
      %p59 = scmp.ne.s32.totalorder %s51, %s54
      %p60 = scmp.eq.s32.totalorder %s20, 0
      %p61 = por %p59, %p60
      %p62 = scmp.ne.s32.totalorder %s51, %s54
      %p63 = scmp.eq.s32.totalorder %s25, 1
      %p64 = por %p62, %p63
      %p65 = scmp.ne.s32.totalorder %s54, %s55
      %p66 = scmp.eq.s32.totalorder %s25, 0
      %p67 = por %p65, %p66
      %p68 = scmp.ne.s32.totalorder %s54, %s55
      %p69 = scmp.eq.s32.totalorder %s26, 1
      %p70 = por %p68, %p69
      %p72 = scmp.ne.s32.totalorder %s55, %s71
      %p73 = scmp.eq.s32.totalorder %s26, 0
      %p74 = por %p72, %p73
      %s75 = ssub.s32 %s20, %s27
      %p76 = scmp.eq.s32.totalorder %s75, 0
      %s78 = sadd.s32 %s77, 1
      %s79 = scalar_select %p76, %s77, %s78
      %p82 = pneg %p76
      %p83 = scmp.eq.s32.totalorder %s20, 1
      %p84 = por %p82, %p83
      %p85 = scmp.ne.s32.totalorder %s77, %s80
      %p86 = scmp.eq.s32.totalorder %s20, 0
      %p87 = por %p85, %p86
      %p88 = scmp.ne.s32.totalorder %s77, %s80
      %p89 = scmp.eq.s32.totalorder %s25, 1
      %p90 = por %p88, %p89
      %p91 = scmp.ne.s32.totalorder %s80, %s81
      %p92 = scmp.eq.s32.totalorder %s25, 0
      %p93 = por %p91, %p92
      %p94 = scmp.ne.s32.totalorder %s80, %s81
      %p95 = scmp.eq.s32.totalorder %s26, 1
      %p96 = por %p94, %p95
      %p98 = scmp.ne.s32.totalorder %s81, %s97
      %p99 = scmp.eq.s32.totalorder %s26, 0
      %p100 = por %p98, %p99
      %s101 = ssub.s32 %s20, %s27
      %p102 = scmp.eq.s32.totalorder %s101, 0
      %s104 = sadd.s32 %s103, 1
      %s105 = scalar_select %p102, %s103, %s104
      %p108 = pneg %p102
      %p109 = scmp.eq.s32.totalorder %s20, 1
      %p110 = por %p108, %p109
      %p111 = scmp.ne.s32.totalorder %s103, %s106
      %p112 = scmp.eq.s32.totalorder %s20, 0
      %p113 = por %p111, %p112
      %p114 = scmp.ne.s32.totalorder %s103, %s106
      %p115 = scmp.eq.s32.totalorder %s25, 1
      %p116 = por %p114, %p115
      %p117 = scmp.ne.s32.totalorder %s106, %s107
      %p118 = scmp.eq.s32.totalorder %s25, 0
      %p119 = por %p117, %p118
      %p120 = scmp.ne.s32.totalorder %s106, %s107
      %p121 = scmp.eq.s32.totalorder %s26, 1
      %p122 = por %p120, %p121
      %p124 = scmp.ne.s32.totalorder %s107, %s123
      %p125 = scmp.eq.s32.totalorder %s26, 0
      %p126 = por %p124, %p125
      %s127 = ssub.s32 %s20, %s27
      %p128 = scmp.eq.s32.totalorder %s127, 0
      %s130 = sadd.s32 %s129, 1
      %s131 = scalar_select %p128, %s129, %s130
      %p134 = pneg %p128
      %p135 = scmp.eq.s32.totalorder %s20, 1
      %p136 = por %p134, %p135
      %p137 = scmp.ne.s32.totalorder %s129, %s132
      %p138 = scmp.eq.s32.totalorder %s20, 0
      %p139 = por %p137, %p138
      %p140 = scmp.ne.s32.totalorder %s129, %s132
      %p141 = scmp.eq.s32.totalorder %s25, 1
      %p142 = por %p140, %p141
      %p143 = scmp.ne.s32.totalorder %s132, %s133
      %p144 = scmp.eq.s32.totalorder %s25, 0
      %p145 = por %p143, %p144
      %p146 = scmp.ne.s32.totalorder %s132, %s133
      %p147 = scmp.eq.s32.totalorder %s26, 1
      %p148 = por %p146, %p147
      %p150 = scmp.ne.s32.totalorder %s133, %s149
      %p151 = scmp.eq.s32.totalorder %s26, 0
      %p152 = por %p150, %p151
      %p153 = scmp.le.s32.totalorder 1, %s20
      %p154 = scmp.lt.s32.totalorder %s20, 3
      %p155 = pnand %p153, %p154
      %p156 = pneg %p155
      // Predicated region
      $region9: #{tpu_custom_call.1} parent=5 // pred_check
        _
      $region10: #{tpu_custom_call.1} parent=5 // pred_check_branch
        %158 = sbr.rel (%p155) target = $region12
      $region11: #{tpu_custom_call.1} parent=5 // pred_region
        %s159 = ssub.s32 %s20, 1
        // Predicated region
        $region13: #{tpu_custom_call.1} parent=11 // pred_check
          %p160 = pneg %p41
        $region14: #{tpu_custom_call.1} parent=11 // pred_check_branch
          %162 = sbr.rel (%p160) target = $region16
        $region15: #{tpu_custom_call.1} parent=11 // pred_region
          %164 = vsyncadd [#allocation3], 0
          %s166 = sshll.u32 %s0, 4
          %s167 = int_to_ptr.hbm [resolvable:$true] %s166
          %s168 = sshll.u32 [#allocation2], 4
          %s169 = int_to_ptr.vmem [resolvable:$true] %s168
          %171 = dma.hbm_to_vmem [thread:$0]  %s167, 512, %s169, [#allocation3]
        $region16: #{tpu_custom_call.1} parent=11 // pred_fallthru
          _
      $region12: #{tpu_custom_call.1} parent=5 // pred_fallthru
        _
      %p172 = scmp.lt.s32.totalorder %s20, 2
      // Predicated region
      $region17: #{tpu_custom_call.1} parent=5 // pred_check
        %p173 = pneg %p172
      $region18: #{tpu_custom_call.1} parent=5 // pred_check_branch
        %175 = sbr.rel (%p173) target = $region20
      $region19: #{tpu_custom_call.1} parent=5 // pred_region
        // Predicated region
        $region21: #{tpu_custom_call.1} parent=19 // pred_check
          %p176 = pneg %p61
        $region22: #{tpu_custom_call.1} parent=19 // pred_check_branch
          %178 = sbr.rel (%p176) target = $region24
        $region23: #{tpu_custom_call.1} parent=19 // pred_region
          %s179 = sand.u32 %s20, 1
          %s180 = scalar_lea.sflag [#allocation6], %s179
          %s181 = sand.u32 %s51, 1
          %s182 = smul.addr %s181, 1024
          %s183 = scalar_lea.vmem [#allocation5], %s182
          %s184 = smul.u32 2, %s20
          %186 = vsyncadd %s180, 0
          %s187 = smul.addr %s184, 8
          %s188 = scalar_lea.hbm %s1, %s187
          %s189 = sshll.u32 %s188, 4
          %s190 = int_to_ptr.hbm [resolvable:$true] %s189
          %s191 = sshll.u32 %s183, 4
          %s192 = int_to_ptr.vmem [resolvable:$true] %s191
          %197 = dma.hbm_to_vmem [thread:$0]  %s190, 16384, %s192, %s180, 512, 256, 16
        $region24: #{tpu_custom_call.1} parent=19 // pred_fallthru
          _
        // Predicated region
        $region25: #{tpu_custom_call.1} parent=19 // pred_check
          %p198 = pneg %p87
        $region26: #{tpu_custom_call.1} parent=19 // pred_check_branch
          %200 = sbr.rel (%p198) target = $region28
        $region27: #{tpu_custom_call.1} parent=19 // pred_region
          %s201 = sand.u32 %s20, 1
          %s202 = scalar_lea.sflag [#allocation6], %s201
          %s203 = sand.u32 %s77, 1
          %s204 = smul.addr %s203, 2
          %s205 = scalar_lea.vmem [#allocation7], %s204
          %s206 = smul.u32 2, %s20
          %208 = vsyncadd %s202, 0
          %s209 = scalar_lea.hbm %s2, %s206
          %s211 = sshll.u32 %s209, 4
          %s212 = int_to_ptr.hbm [resolvable:$true] %s211
          %s213 = sshll.u32 %s205, 4
          %s214 = int_to_ptr.vmem [resolvable:$true] %s213
          %216 = dma.hbm_to_vmem [thread:$0]  %s212, 32, %s214, %s202
        $region28: #{tpu_custom_call.1} parent=19 // pred_fallthru
          _
        // Predicated region
        $region29: #{tpu_custom_call.1} parent=19 // pred_check
          %p217 = pneg %p113
        $region30: #{tpu_custom_call.1} parent=19 // pred_check_branch
          %219 = sbr.rel (%p217) target = $region32
        $region31: #{tpu_custom_call.1} parent=19 // pred_region
          %s220 = sand.u32 %s103, 1
          %s221 = scalar_lea.sflag [#allocation9], %s220
          %s222 = sand.u32 %s103, 1
          %s223 = smul.addr %s222, 2
          %s224 = scalar_lea.vmem [#allocation8], %s223
          %s225 = smul.u32 2, %s20
          %227 = vsyncadd %s221, 0
          %s228 = scalar_lea.hbm %s3, %s225
          %s230 = sshll.u32 %s228, 4
          %s231 = int_to_ptr.hbm [resolvable:$true] %s230
          %s232 = sshll.u32 %s224, 4
          %s233 = int_to_ptr.vmem [resolvable:$true] %s232
          %235 = dma.hbm_to_vmem [thread:$0]  %s231, 32, %s233, %s221
        $region32: #{tpu_custom_call.1} parent=19 // pred_fallthru
          _
      $region20: #{tpu_custom_call.1} parent=5 // pred_fallthru
        _
      %p236 = scmp.le.s32.totalorder 1, %s20
      %p237 = scmp.lt.s32.totalorder %s20, 3
      %p238 = pnand %p236, %p237
      %p239 = pneg %p238
      // Predicated region
      $region33: #{tpu_custom_call.1} parent=5 // pred_check
        _
      $region34: #{tpu_custom_call.1} parent=5 // pred_check_branch
        %241 = sbr.rel (%p238) target = $region36
      $region35: #{tpu_custom_call.1} parent=5 // pred_region
        %s242 = ssub.s32 %s20, 1
        // Predicated region
        $region37: #{tpu_custom_call.1} parent=35 // pred_check
          %p243 = pneg %p41
        $region38: #{tpu_custom_call.1} parent=35 // pred_check_branch
          %245 = sbr.rel (%p243) target = $region40
        $region39: #{tpu_custom_call.1} parent=35 // pred_region
          %247 = dma.done [#allocation3], 512
        $region40: #{tpu_custom_call.1} parent=35 // pred_fallthru
          _
        %s248 = sand.u32 %s25, 1
        %s249 = scalar_lea.sflag [#allocation6], %s248
        %s250 = sand.u32 %s54, 1
        %s251 = smul.addr %s250, 1024
        %s252 = scalar_lea.vmem [#allocation5], %s251
        // Predicated region
        $region41: #{tpu_custom_call.1} parent=35 // pred_check
          %p253 = pneg %p67
        $region42: #{tpu_custom_call.1} parent=35 // pred_check_branch
          %255 = sbr.rel (%p253) target = $region44
        $region43: #{tpu_custom_call.1} parent=35 // pred_region
          %257 = dma.done %s249, 16384
        $region44: #{tpu_custom_call.1} parent=35 // pred_fallthru
          _
        %s258 = sand.u32 %s25, 1
        %s259 = scalar_lea.sflag [#allocation6], %s258
        %s260 = sand.u32 %s80, 1
        %s261 = smul.addr %s260, 2
        %s262 = scalar_lea.vmem [#allocation7], %s261
        // Predicated region
        $region45: #{tpu_custom_call.1} parent=35 // pred_check
          %p263 = pneg %p93
        $region46: #{tpu_custom_call.1} parent=35 // pred_check_branch
          %265 = sbr.rel (%p263) target = $region48
        $region47: #{tpu_custom_call.1} parent=35 // pred_region
          %267 = dma.done %s259, 32
        $region48: #{tpu_custom_call.1} parent=35 // pred_fallthru
          _
        %s268 = sand.u32 %s106, 1
        %s269 = scalar_lea.sflag [#allocation9], %s268
        %s270 = sand.u32 %s106, 1
        %s271 = smul.addr %s270, 2
        %s272 = scalar_lea.vmem [#allocation8], %s271
        // Predicated region
        $region49: #{tpu_custom_call.1} parent=35 // pred_check
          %p273 = pneg %p119
        $region50: #{tpu_custom_call.1} parent=35 // pred_check_branch
          %275 = sbr.rel (%p273) target = $region52
        $region51: #{tpu_custom_call.1} parent=35 // pred_region
          %277 = dma.done %s269, 32
        $region52: #{tpu_custom_call.1} parent=35 // pred_fallthru
          _
        %p278 = pneg %p41
        %p279 = pneg %p38
        %s280 = sand.u32 %s25, 1
        %s281 = scalar_lea.sflag [#allocation6], %s280
        %s282 = sand.u32 %s54, 1
        %s283 = smul.addr %s282, 1024
        %s284 = scalar_lea.vmem [#allocation5], %s283
        %p285 = pneg %p67
        %p286 = pneg %p64
        %s287 = sand.u32 %s25, 1
        %s288 = scalar_lea.sflag [#allocation6], %s287
        %s289 = sand.u32 %s80, 1
        %s290 = smul.addr %s289, 2
        %s291 = scalar_lea.vmem [#allocation7], %s290
        %p292 = pneg %p93
        %p293 = pneg %p90
        %s294 = sand.u32 %s106, 1
        %s295 = scalar_lea.sflag [#allocation9], %s294
        %s296 = sand.u32 %s106, 1
        %s297 = smul.addr %s296, 2
        %s298 = scalar_lea.vmem [#allocation8], %s297
        %p299 = pneg %p119
        %p300 = pneg %p116
        %p301 = pneg %p145
        %p302 = pneg %p142
        %s303 = sand.u32 %s132, 1
        %s304 = scalar_lea.sflag [#allocation4], %s303
        %s305 = sand.u32 %s132, 1
        %s306 = smul.addr %s305, 16
        %s307 = scalar_lea.vmem [#allocation10], %s306
        %s308 = smul.u32 2, %s25
        %s309 = smul.u32 2, %s25
        %s310 = smul.u32 2, %s25
        %s311 = smul.u32 2, %s25
        %v312 = vld [vmem:[#allocation2] sm:$0xff]
        %v313 = vld [vmem:[#allocation2 + $0x8] sm:$0xff]
        %v314 = vld [vmem:[#allocation2 + $0x10] sm:$0xff]
        %v315 = vld [vmem:[#allocation2 + $0x18] sm:$0xff]
        %v316 = vld [vmem:[%s252] sm:$0xff]
        %v317 = vld [vmem:[%s252 + $0x8] sm:$0xff]
        %v318 = vld [vmem:[%s252 + $0x10] sm:$0xff]
        %v319 = vld [vmem:[%s252 + $0x18] sm:$0xff]
        %v320 = vld [vmem:[%s252 + $0x20] sm:$0xff]
        %v321 = vld [vmem:[%s252 + $0x28] sm:$0xff]
        %v322 = vld [vmem:[%s252 + $0x30] sm:$0xff]
        %v323 = vld [vmem:[%s252 + $0x38] sm:$0xff]
        %v324 = vld [vmem:[%s252 + $0x40] sm:$0xff]
        %v325 = vld [vmem:[%s252 + $0x48] sm:$0xff]
        %v326 = vld [vmem:[%s252 + $0x50] sm:$0xff]
        %v327 = vld [vmem:[%s252 + $0x58] sm:$0xff]
        %v328 = vld [vmem:[%s252 + $0x60] sm:$0xff]
        %v329 = vld [vmem:[%s252 + $0x68] sm:$0xff]
        %v330 = vld [vmem:[%s252 + $0x70] sm:$0xff]
        %v331 = vld [vmem:[%s252 + $0x78] sm:$0xff]
        %v332 = vld [vmem:[%s252 + $0x80] sm:$0xff]
        %v333 = vld [vmem:[%s252 + $0x88] sm:$0xff]
        %v334 = vld [vmem:[%s252 + $0x90] sm:$0xff]
        %v335 = vld [vmem:[%s252 + $0x98] sm:$0xff]
        %v336 = vld [vmem:[%s252 + $0xa0] sm:$0xff]
        %v337 = vld [vmem:[%s252 + $0xa8] sm:$0xff]
        %v338 = vld [vmem:[%s252 + $0xb0] sm:$0xff]
        %v339 = vld [vmem:[%s252 + $0xb8] sm:$0xff]
        %v340 = vld [vmem:[%s252 + $0xc0] sm:$0xff]
        %v341 = vld [vmem:[%s252 + $0xc8] sm:$0xff]
        %v342 = vld [vmem:[%s252 + $0xd0] sm:$0xff]
        %v343 = vld [vmem:[%s252 + $0xd8] sm:$0xff]
        %v344 = vld [vmem:[%s252 + $0xe0] sm:$0xff]
        %v345 = vld [vmem:[%s252 + $0xe8] sm:$0xff]
        %v346 = vld [vmem:[%s252 + $0xf0] sm:$0xff]
        %v347 = vld [vmem:[%s252 + $0xf8] sm:$0xff]
        %v348 = vld [vmem:[%s252 + $0x100] sm:$0xff]
        %v349 = vld [vmem:[%s252 + $0x108] sm:$0xff]
        %v350 = vld [vmem:[%s252 + $0x110] sm:$0xff]
        %v351 = vld [vmem:[%s252 + $0x118] sm:$0xff]
        %v352 = vld [vmem:[%s252 + $0x120] sm:$0xff]
        %v353 = vld [vmem:[%s252 + $0x128] sm:$0xff]
        %v354 = vld [vmem:[%s252 + $0x130] sm:$0xff]
        %v355 = vld [vmem:[%s252 + $0x138] sm:$0xff]
        %v356 = vld [vmem:[%s252 + $0x140] sm:$0xff]
        %v357 = vld [vmem:[%s252 + $0x148] sm:$0xff]
        %v358 = vld [vmem:[%s252 + $0x150] sm:$0xff]
        %v359 = vld [vmem:[%s252 + $0x158] sm:$0xff]
        %v360 = vld [vmem:[%s252 + $0x160] sm:$0xff]
        %v361 = vld [vmem:[%s252 + $0x168] sm:$0xff]
        %v362 = vld [vmem:[%s252 + $0x170] sm:$0xff]
        %v363 = vld [vmem:[%s252 + $0x178] sm:$0xff]
        %v364 = vld [vmem:[%s252 + $0x180] sm:$0xff]
        %v365 = vld [vmem:[%s252 + $0x188] sm:$0xff]
        %v366 = vld [vmem:[%s252 + $0x190] sm:$0xff]
        %v367 = vld [vmem:[%s252 + $0x198] sm:$0xff]
        %v368 = vld [vmem:[%s252 + $0x1a0] sm:$0xff]
        %v369 = vld [vmem:[%s252 + $0x1a8] sm:$0xff]
        %v370 = vld [vmem:[%s252 + $0x1b0] sm:$0xff]
        %v371 = vld [vmem:[%s252 + $0x1b8] sm:$0xff]
        %v372 = vld [vmem:[%s252 + $0x1c0] sm:$0xff]
        %v373 = vld [vmem:[%s252 + $0x1c8] sm:$0xff]
        %v374 = vld [vmem:[%s252 + $0x1d0] sm:$0xff]
        %v375 = vld [vmem:[%s252 + $0x1d8] sm:$0xff]
        %v376 = vld [vmem:[%s252 + $0x1e0] sm:$0xff]
        %v377 = vld [vmem:[%s252 + $0x1e8] sm:$0xff]
        %v378 = vld [vmem:[%s252 + $0x1f0] sm:$0xff]
        %v379 = vld [vmem:[%s252 + $0x1f8] sm:$0xff]
        %v380 = vld [vmem:[%s252 + $0x200] sm:$0xff]
        %v381 = vld [vmem:[%s252 + $0x208] sm:$0xff]
        %v382 = vld [vmem:[%s252 + $0x210] sm:$0xff]
        %v383 = vld [vmem:[%s252 + $0x218] sm:$0xff]
        %v384 = vld [vmem:[%s252 + $0x220] sm:$0xff]
        %v385 = vld [vmem:[%s252 + $0x228] sm:$0xff]
        %v386 = vld [vmem:[%s252 + $0x230] sm:$0xff]
        %v387 = vld [vmem:[%s252 + $0x238] sm:$0xff]
        %v388 = vld [vmem:[%s252 + $0x240] sm:$0xff]
        %v389 = vld [vmem:[%s252 + $0x248] sm:$0xff]
        %v390 = vld [vmem:[%s252 + $0x250] sm:$0xff]
        %v391 = vld [vmem:[%s252 + $0x258] sm:$0xff]
        %v392 = vld [vmem:[%s252 + $0x260] sm:$0xff]
        %v393 = vld [vmem:[%s252 + $0x268] sm:$0xff]
        %v394 = vld [vmem:[%s252 + $0x270] sm:$0xff]
        %v395 = vld [vmem:[%s252 + $0x278] sm:$0xff]
        %v396 = vld [vmem:[%s252 + $0x280] sm:$0xff]
        %v397 = vld [vmem:[%s252 + $0x288] sm:$0xff]
        %v398 = vld [vmem:[%s252 + $0x290] sm:$0xff]
        %v399 = vld [vmem:[%s252 + $0x298] sm:$0xff]
        %v400 = vld [vmem:[%s252 + $0x2a0] sm:$0xff]
        %v401 = vld [vmem:[%s252 + $0x2a8] sm:$0xff]
        %v402 = vld [vmem:[%s252 + $0x2b0] sm:$0xff]
        %v403 = vld [vmem:[%s252 + $0x2b8] sm:$0xff]
        %v404 = vld [vmem:[%s252 + $0x2c0] sm:$0xff]
        %v405 = vld [vmem:[%s252 + $0x2c8] sm:$0xff]
        %v406 = vld [vmem:[%s252 + $0x2d0] sm:$0xff]
        %v407 = vld [vmem:[%s252 + $0x2d8] sm:$0xff]
        %v408 = vld [vmem:[%s252 + $0x2e0] sm:$0xff]
        %v409 = vld [vmem:[%s252 + $0x2e8] sm:$0xff]
        %v410 = vld [vmem:[%s252 + $0x2f0] sm:$0xff]
        %v411 = vld [vmem:[%s252 + $0x2f8] sm:$0xff]
        %v412 = vld [vmem:[%s252 + $0x300] sm:$0xff]
        %v413 = vld [vmem:[%s252 + $0x308] sm:$0xff]
        %v414 = vld [vmem:[%s252 + $0x310] sm:$0xff]
        %v415 = vld [vmem:[%s252 + $0x318] sm:$0xff]
        %v416 = vld [vmem:[%s252 + $0x320] sm:$0xff]
        %v417 = vld [vmem:[%s252 + $0x328] sm:$0xff]
        %v418 = vld [vmem:[%s252 + $0x330] sm:$0xff]
        %v419 = vld [vmem:[%s252 + $0x338] sm:$0xff]
        %v420 = vld [vmem:[%s252 + $0x340] sm:$0xff]
        %v421 = vld [vmem:[%s252 + $0x348] sm:$0xff]
        %v422 = vld [vmem:[%s252 + $0x350] sm:$0xff]
        %v423 = vld [vmem:[%s252 + $0x358] sm:$0xff]
        %v424 = vld [vmem:[%s252 + $0x360] sm:$0xff]
        %v425 = vld [vmem:[%s252 + $0x368] sm:$0xff]
        %v426 = vld [vmem:[%s252 + $0x370] sm:$0xff]
        %v427 = vld [vmem:[%s252 + $0x378] sm:$0xff]
        %v428 = vld [vmem:[%s252 + $0x380] sm:$0xff]
        %v429 = vld [vmem:[%s252 + $0x388] sm:$0xff]
        %v430 = vld [vmem:[%s252 + $0x390] sm:$0xff]
        %v431 = vld [vmem:[%s252 + $0x398] sm:$0xff]
        %v432 = vld [vmem:[%s252 + $0x3a0] sm:$0xff]
        %v433 = vld [vmem:[%s252 + $0x3a8] sm:$0xff]
        %v434 = vld [vmem:[%s252 + $0x3b0] sm:$0xff]
        %v435 = vld [vmem:[%s252 + $0x3b8] sm:$0xff]
        %v436 = vld [vmem:[%s252 + $0x3c0] sm:$0xff]
        %v437 = vld [vmem:[%s252 + $0x3c8] sm:$0xff]
        %v438 = vld [vmem:[%s252 + $0x3d0] sm:$0xff]
        %v439 = vld [vmem:[%s252 + $0x3d8] sm:$0xff]
        %v440 = vld [vmem:[%s252 + $0x3e0] sm:$0xff]
        %v441 = vld [vmem:[%s252 + $0x3e8] sm:$0xff]
        %v442 = vld [vmem:[%s252 + $0x3f0] sm:$0xff]
        %v443 = vld [vmem:[%s252 + $0x3f8] sm:$0xff]
        %444 = vmatpush.msra.mxu0 %v346
        %445 = vmatpush.msra.mxu0 %v344
        %446 = vmatpush.msra.mxu0 %v342
        %447 = vmatpush.msra.mxu0 %v340
        %448 = vmatpush.msra.mxu0 %v338
        %449 = vmatpush.msra.mxu0 %v336
        %450 = vmatpush.msra.mxu0 %v334
        %451 = vmatpush.msra.mxu0 %v332
        %452 = vmatpush.msra.mxu0 %v330
        %453 = vmatpush.msra.mxu0 %v328
        %454 = vmatpush.msra.mxu0 %v326
        %455 = vmatpush.msra.mxu0 %v324
        %456 = vmatpush.msra.mxu0 %v322
        %457 = vmatpush.msra.mxu0 %v320
        %458 = vmatpush.msra.mxu0 %v318
        %459 = vmatpush.msra.mxu0 %v316
        %460 = vmatmul.f32.gmra.mxu0 %v312
        %v461 = vpop.f32.mrf.mxu0
        %v462 = vadd.f32 0.0, %v461
        %463 = vdwg.mxu0
        %464 = vmatpush.msra.mxu0 %v378
        %465 = vmatpush.msra.mxu0 %v376
        %466 = vmatpush.msra.mxu0 %v374
        %467 = vmatpush.msra.mxu0 %v372
        %468 = vmatpush.msra.mxu0 %v370
        %469 = vmatpush.msra.mxu0 %v368
        %470 = vmatpush.msra.mxu0 %v366
        %471 = vmatpush.msra.mxu0 %v364
        %472 = vmatpush.msra.mxu0 %v362
        %473 = vmatpush.msra.mxu0 %v360
        %474 = vmatpush.msra.mxu0 %v358
        %475 = vmatpush.msra.mxu0 %v356
        %476 = vmatpush.msra.mxu0 %v354
        %477 = vmatpush.msra.mxu0 %v352
        %478 = vmatpush.msra.mxu0 %v350
        %479 = vmatpush.msra.mxu0 %v348
        %480 = vmatmul.f32.gmra.mxu0 %v313
        %v481 = vpop.f32.mrf.mxu0
        %v482 = vadd.f32 %v462, %v481
        %483 = vdwg.mxu0
        %484 = vmatpush.msra.mxu0 %v410
        %485 = vmatpush.msra.mxu0 %v408
        %486 = vmatpush.msra.mxu0 %v406
        %487 = vmatpush.msra.mxu0 %v404
        %488 = vmatpush.msra.mxu0 %v402
        %489 = vmatpush.msra.mxu0 %v400
        %490 = vmatpush.msra.mxu0 %v398
        %491 = vmatpush.msra.mxu0 %v396
        %492 = vmatpush.msra.mxu0 %v394
        %493 = vmatpush.msra.mxu0 %v392
        %494 = vmatpush.msra.mxu0 %v390
        %495 = vmatpush.msra.mxu0 %v388
        %496 = vmatpush.msra.mxu0 %v386
        %497 = vmatpush.msra.mxu0 %v384
        %498 = vmatpush.msra.mxu0 %v382
        %499 = vmatpush.msra.mxu0 %v380
        %500 = vmatmul.f32.gmra.mxu0 %v314
        %v501 = vpop.f32.mrf.mxu0
        %v502 = vadd.f32 %v482, %v501
        %503 = vdwg.mxu0
        %504 = vmatpush.msra.mxu0 %v442
        %505 = vmatpush.msra.mxu0 %v440
        %506 = vmatpush.msra.mxu0 %v438
        %507 = vmatpush.msra.mxu0 %v436
        %508 = vmatpush.msra.mxu0 %v434
        %509 = vmatpush.msra.mxu0 %v432
        %510 = vmatpush.msra.mxu0 %v430
        %511 = vmatpush.msra.mxu0 %v428
        %512 = vmatpush.msra.mxu0 %v426
        %513 = vmatpush.msra.mxu0 %v424
        %514 = vmatpush.msra.mxu0 %v422
        %515 = vmatpush.msra.mxu0 %v420
        %516 = vmatpush.msra.mxu0 %v418
        %517 = vmatpush.msra.mxu0 %v416
        %518 = vmatpush.msra.mxu0 %v414
        %519 = vmatpush.msra.mxu0 %v412
        %520 = vmatmul.f32.gmra.mxu0 %v315
        %v521 = vpop.f32.mrf.mxu0
        %v522 = vadd.f32 %v502, %v521
        %523 = vdwg.mxu0
        %524 = vmatpush.msra.mxu0 %v347
        %525 = vmatpush.msra.mxu0 %v345
        %526 = vmatpush.msra.mxu0 %v343
        %527 = vmatpush.msra.mxu0 %v341
        %528 = vmatpush.msra.mxu0 %v339
        %529 = vmatpush.msra.mxu0 %v337
        %530 = vmatpush.msra.mxu0 %v335
        %531 = vmatpush.msra.mxu0 %v333
        %532 = vmatpush.msra.mxu0 %v331
        %533 = vmatpush.msra.mxu0 %v329
        %534 = vmatpush.msra.mxu0 %v327
        %535 = vmatpush.msra.mxu0 %v325
        %536 = vmatpush.msra.mxu0 %v323
        %537 = vmatpush.msra.mxu0 %v321
        %538 = vmatpush.msra.mxu0 %v319
        %539 = vmatpush.msra.mxu0 %v317
        %540 = vmatmul.f32.gmra.mxu0 %v312
        %v541 = vpop.f32.mrf.mxu0
        %v542 = vadd.f32 0.0, %v541
        %543 = vdwg.mxu0
        %544 = vmatpush.msra.mxu0 %v379
        %545 = vmatpush.msra.mxu0 %v377
        %546 = vmatpush.msra.mxu0 %v375
        %547 = vmatpush.msra.mxu0 %v373
        %548 = vmatpush.msra.mxu0 %v371
        %549 = vmatpush.msra.mxu0 %v369
        %550 = vmatpush.msra.mxu0 %v367
        %551 = vmatpush.msra.mxu0 %v365
        %552 = vmatpush.msra.mxu0 %v363
        %553 = vmatpush.msra.mxu0 %v361
        %554 = vmatpush.msra.mxu0 %v359
        %555 = vmatpush.msra.mxu0 %v357
        %556 = vmatpush.msra.mxu0 %v355
        %557 = vmatpush.msra.mxu0 %v353
        %558 = vmatpush.msra.mxu0 %v351
        %559 = vmatpush.msra.mxu0 %v349
        %560 = vmatmul.f32.gmra.mxu0 %v313
        %v561 = vpop.f32.mrf.mxu0
        %v562 = vadd.f32 %v542, %v561
        %563 = vdwg.mxu0
        %564 = vmatpush.msra.mxu0 %v411
        %565 = vmatpush.msra.mxu0 %v409
        %566 = vmatpush.msra.mxu0 %v407
        %567 = vmatpush.msra.mxu0 %v405
        %568 = vmatpush.msra.mxu0 %v403
        %569 = vmatpush.msra.mxu0 %v401
        %570 = vmatpush.msra.mxu0 %v399
        %571 = vmatpush.msra.mxu0 %v397
        %572 = vmatpush.msra.mxu0 %v395
        %573 = vmatpush.msra.mxu0 %v393
        %574 = vmatpush.msra.mxu0 %v391
        %575 = vmatpush.msra.mxu0 %v389
        %576 = vmatpush.msra.mxu0 %v387
        %577 = vmatpush.msra.mxu0 %v385
        %578 = vmatpush.msra.mxu0 %v383
        %579 = vmatpush.msra.mxu0 %v381
        %580 = vmatmul.f32.gmra.mxu0 %v314
        %v581 = vpop.f32.mrf.mxu0
        %v582 = vadd.f32 %v562, %v581
        %583 = vdwg.mxu0
        %584 = vmatpush.msra.mxu0 %v443
        %585 = vmatpush.msra.mxu0 %v441
        %586 = vmatpush.msra.mxu0 %v439
        %587 = vmatpush.msra.mxu0 %v437
        %588 = vmatpush.msra.mxu0 %v435
        %589 = vmatpush.msra.mxu0 %v433
        %590 = vmatpush.msra.mxu0 %v431
        %591 = vmatpush.msra.mxu0 %v429
        %592 = vmatpush.msra.mxu0 %v427
        %593 = vmatpush.msra.mxu0 %v425
        %594 = vmatpush.msra.mxu0 %v423
        %595 = vmatpush.msra.mxu0 %v421
        %596 = vmatpush.msra.mxu0 %v419
        %597 = vmatpush.msra.mxu0 %v417
        %598 = vmatpush.msra.mxu0 %v415
        %599 = vmatpush.msra.mxu0 %v413
        %600 = vmatmul.f32.gmra.mxu0 %v315
        %v601 = vpop.f32.mrf.mxu0
        %v602 = vadd.f32 %v582, %v601
        %603 = vdwg.mxu0
        %v604 = vrot.slane %v522, 4
        %v605 = vadd.f32 %v522, %v604
        %v606 = vrot.slane %v605, 2
        %v607 = vadd.f32 %v605, %v606
        %v608 = vrot.slane %v607, 1
        %v609 = vadd.f32 %v607, %v608
        %v610 = vrot.slane %v602, 4
        %v611 = vadd.f32 %v602, %v610
        %v612 = vrot.slane %v611, 2
        %v613 = vadd.f32 %v611, %v612
        %v614 = vrot.slane %v613, 1
        %v615 = vadd.f32 %v613, %v614
        %v616 = vmul.f32 %v609, 0.125
        %v617 = vmul.f32 %v615, 0.125
        %v618 = vsub.f32 %v522, %v616
        %v619 = vsub.f32 %v602, %v617
        %v620 = vmul.f32 %v618, %v618
        %v621 = vmul.f32 %v619, %v619
        %v622 = vrot.slane %v620, 4
        %v623 = vadd.f32 %v620, %v622
        %v624 = vrot.slane %v623, 2
        %v625 = vadd.f32 %v623, %v624
        %v626 = vrot.slane %v625, 1
        %v627 = vadd.f32 %v625, %v626
        %v628 = vrot.slane %v621, 4
        %v629 = vadd.f32 %v621, %v628
        %v630 = vrot.slane %v629, 2
        %v631 = vadd.f32 %v629, %v630
        %v632 = vrot.slane %v631, 1
        %v633 = vadd.f32 %v631, %v632
        %v634 = vmul.f32 %v627, 0.125
        %v635 = vmul.f32 %v633, 0.125
        %v636 = vadd.f32 %v634, 1e-05
        %v637 = vadd.f32 %v635, 1e-05
        %v638 = vrsqrt.pop %v636
        %v639 = vmul.f32 %v638, %v636
        %v640 = vmul.f32 %v639, %v638
        %v641 = vmul.f32 0.5, %v640
        %v642 = vsub.f32 1.5, %v641
        %v643 = vmul.f32 %v638, %v642
        %vm644 = vweird.f32 %v636
        %vm645 = vweird.f32 %v638
        %vm646 = vmor %vm644, %vm645
        %v647 = vsel %vm646, %v638, %v643
        %v648 = vrsqrt.pop %v637
        %v649 = vmul.f32 %v648, %v637
        %v650 = vmul.f32 %v649, %v648
        %v651 = vmul.f32 0.5, %v650
        %v652 = vsub.f32 1.5, %v651
        %v653 = vmul.f32 %v648, %v652
        %vm654 = vweird.f32 %v637
        %vm655 = vweird.f32 %v648
        %vm656 = vmor %vm654, %vm655
        %v657 = vsel %vm656, %v648, %v653
        %v658 = vld [vmem:[%s262] sm:$0x3]
        %v660 = vperm.slane %v658, 0
        %v661 = vperm.slane %v658, 1
        %v664 = vmul.f32 %v647, %v660
        %v665 = vmul.f32 %v657, %v661
        %v666 = vperm.slane %v664, 0
        %v667 = vperm.slane %v665, 0
        %v668 = vmul.f32 %v618, %v666
        %v669 = vmul.f32 %v619, %v667
        %v670 = vld [vmem:[%s272] sm:$0x3]
        %v672 = vperm.slane %v670, 0
        %v673 = vperm.slane %v670, 1
        %v676 = vadd.f32 %v668, %v672
        %v677 = vadd.f32 %v669, %v673
        %678 = vst [vmem:[%s307] sm:$0xff] %v676
        %679 = vst [vmem:[%s307 + $0x8] sm:$0xff] %v677
        %s680 = sand.u32 %s132, 1
        %s681 = scalar_lea.sflag [#allocation4], %s680
        %s682 = sand.u32 %s132, 1
        %s683 = smul.addr %s682, 16
        %s684 = scalar_lea.vmem [#allocation10], %s683
        // Predicated region
        $region53: #{tpu_custom_call.1} parent=35 // pred_check
          %p685 = pneg %p142
        $region54: #{tpu_custom_call.1} parent=35 // pred_check_branch
          %687 = sbr.rel (%p685) target = $region56
        $region55: #{tpu_custom_call.1} parent=35 // pred_region
          %s688 = smul.u32 2, %s25
          %690 = vsyncadd %s681, 0
          %s691 = smul.addr %s688, 8
          %s692 = scalar_lea.hbm %s4, %s691
          %s694 = sshll.u32 %s684, 4
          %s695 = int_to_ptr.vmem [resolvable:$true] %s694
          %s696 = sshll.u32 %s692, 4
          %s697 = int_to_ptr.hbm [resolvable:$true] %s696
          %699 = dma.vmem_to_hbm [thread:$0]  %s695, 256, %s697, %s681
        $region56: #{tpu_custom_call.1} parent=35 // pred_fallthru
          _
      $region36: #{tpu_custom_call.1} parent=5 // pred_fallthru
        _
      %p700 = scmp.le.s32.totalorder 2, %s20
      // Predicated region
      $region57: #{tpu_custom_call.1} parent=5 // pred_check
        %p701 = pneg %p700
      $region58: #{tpu_custom_call.1} parent=5 // pred_check_branch
        %703 = sbr.rel (%p701) target = $region60
      $region59: #{tpu_custom_call.1} parent=5 // pred_region
        %s704 = ssub.s32 %s20, 2
        // Predicated region
        $region61: #{tpu_custom_call.1} parent=59 // pred_check
          %p705 = pneg %p148
        $region62: #{tpu_custom_call.1} parent=59 // pred_check_branch
          %707 = sbr.rel (%p705) target = $region64
        $region63: #{tpu_custom_call.1} parent=59 // pred_region
          %s708 = sand.u32 %s133, 1
          %s709 = scalar_lea.sflag [#allocation4], %s708
          %s710 = sand.u32 %s133, 1
          %s711 = smul.addr %s710, 16
          %s712 = scalar_lea.vmem [#allocation10], %s711
          %714 = dma.done %s709, 256
        $region64: #{tpu_custom_call.1} parent=59 // pred_fallthru
          _
      $region60: #{tpu_custom_call.1} parent=5 // pred_fallthru
        _
    $region6: #{tpu_custom_call.1} parent=1 // loop_footer
      %s24 = sadd.s32 1, %s20
    $region7: #{tpu_custom_call.1} parent=1 // loop_footer_branch
      %19 = sbr.rel target = $region3
    $region8: #{tpu_custom_call.1} parent=1 // loop_exit
      _
    %715 = vsyncpa [#allocation3], 1
    %s716 = scalar_lea.sflag [#allocation3], 1
    %717 = vsyncpa %s716, 1
    %718 = vsyncpa [#allocation6], 1
    %s719 = scalar_lea.sflag [#allocation6], 1
    %720 = vsyncpa %s719, 1
    %721 = vsyncpa [#allocation9], 1
    %s722 = scalar_lea.sflag [#allocation9], 1
    %723 = vsyncpa %s722, 1
    %724 = vsyncpa [#allocation4], 1
    %s725 = scalar_lea.sflag [#allocation4], 1
    %726 = vsyncpa %s725, 1

</llo_original>
